<compile_context>
chip_gen: v7x
topology: tpu7x:2x2x1
jax: 0.10.0
libtpu: 0.0.40
codegen_flags: <defaults>
</compile_context>

<pallas_src>
import functools

import jax
import jax.numpy as jnp
from jax.experimental import pallas as pl
from jax.experimental.pallas import tpu as pltpu


_HIDDEN = 128


def _round_up(x, m):
    return (x + m - 1) // m * m


def _rep2mut_kernel(scalars_ref,
                    wt_x_ref, mt_x_ref, pos_ref,
                    w_wt_ref, b_wt_ref,
                    w_mt_ref, b_mt_ref,
                    w_out_h_ref, w_out_p_ref,
                    out_ref, *, apply_sigmoid):
    a1 = scalars_ref[0]      # PReLU alpha (wt branch), shared scalar
    a2 = scalars_ref[1]      # PReLU alpha (mt branch)
    b_out = scalars_ref[2]   # output-layer bias (scalar)

    # wt branch: Linear -> PReLU (single shared alpha, PyTorch default).
    wt_h = jnp.dot(wt_x_ref[...], w_wt_ref[...],
                   preferred_element_type=jnp.float32) + b_wt_ref[...]
    wt_h = jnp.where(wt_h >= 0.0, wt_h, a1 * wt_h)

    # mt branch: Linear -> PReLU.
    mt_h = jnp.dot(mt_x_ref[...], w_mt_ref[...],
                   preferred_element_type=jnp.float32) + b_mt_ref[...]
    mt_h = jnp.where(mt_h >= 0.0, mt_h, a2 * mt_h)

    # Dropout layers are identity in eval mode.
    # TODO(synk): training-mode dropout (rate=0.2) not implemented.
    prod = wt_h * mt_h                                   # [tb, 128], f32

    # Output linear (out_features = 1): VPU multiply + XLU lane reduce instead
    # of width-1 MXU dots.  Reshape (major-dim split, layout-trivial) BEFORE
    # the reduction so the result is already lane-dense: out[g, l] is the
    # projection of batch row g*128 + l within this tile.
    _, g, lanes = out_ref.shape                          # (1, tb//128, 128)
    pos = pos_ref[...].astype(jnp.float32)               # [tb, P]

    ph = (prod * w_out_h_ref[...]).reshape(g, lanes, prod.shape[-1])
    pp = (pos * w_out_p_ref[...].astype(jnp.float32)).reshape(
        g, lanes, pos.shape[-1])
    out = ph.sum(axis=-1) + pp.sum(axis=-1) + b_out      # [g, 128]

    if apply_sigmoid:
        out = jax.nn.sigmoid(out)

    out_ref[0] = out.astype(out_ref.dtype)


def rep2mut_forward(wt_x, mt_x, pos_x, params, output='0', block_b=None):
    """Rep2Mut forward pass (float32 compute).

    Activation streams are used in whatever dtype the caller stores them
    (bf16 inputs halve the dominant HBM streams on v6e/v7x); no wrapper-side
    casts or pads of the big arrays are performed.
    """
    B, D = wt_x.shape
    P = pos_x.shape[1]
    apply_sigmoid = (output == 'Tat')

    w_wt, b_wt = params['wt_linear1']          # [D, 128], [1, 128]
    w_mt, b_mt = params['mt_linear1']          # [D, 128], [1, 128]
    a1 = params['prelu1_alpha']                # [1]
    a2 = params['prelu2_alpha']                # [1]
    w_out, b_out = params['outputs'][output]   # [128 + P, 1], [1, 1]

    def _f32_if_f64(x):
        return x.astype(jnp.float32) if x.dtype == jnp.float64 else x

    # Activations: NO wrapper-side cast/pad (each would be a full HBM pass).
    wt_x = _f32_if_f64(wt_x)
    mt_x = _f32_if_f64(mt_x)
    pos_x = _f32_if_f64(pos_x)

    # Weights / biases are tiny; normalizing them costs nothing.
    w_wt = _f32_if_f64(w_wt)
    w_mt = _f32_if_f64(w_mt)
    b_wt = jnp.asarray(b_wt, jnp.float32).reshape(1, _HIDDEN)
    b_mt = jnp.asarray(b_mt, jnp.float32).reshape(1, _HIDDEN)

    w_out_f = jnp.asarray(w_out, jnp.float32)
    w_out_h_row = w_out_f[:_HIDDEN, 0].reshape(1, _HIDDEN)
    w_out_p_row = w_out_f[_HIDDEN:, 0].reshape(1, P)

    # Scalars merged into a single SMEM vector: [alpha1, alpha2, b_out].
    scalars = jnp.concatenate([
        jnp.asarray(a1, jnp.float32).reshape(1),
        jnp.asarray(a2, jnp.float32).reshape(1),
        jnp.asarray(b_out, jnp.float32).reshape(1)])

    # ---- per-chip VMEM budget & batch-tile selection --------------------
    vmem_cap = 64 << 20            # conservative fallback (v7x per-TC VMEM)
    try:
        info = pltpu.get_tpu_info()
        vmem_cap = int(getattr(info, "vmem_capacity_bytes", vmem_cap))
    except Exception:
        pass
    budget = vmem_cap - max(16 << 20, vmem_cap // 4)   # 48 MiB v7x, ~96 MiB v5e/v6e

    in_bytes = jnp.dtype(wt_x.dtype).itemsize
    w_bytes = jnp.dtype(w_wt.dtype).itemsize
    per_row = (2 * 2 * D * in_bytes       # wt_x + mt_x tiles, double-buffered
               + 2 * 128 * 4              # pos tile (128-lane padded in VMEM), x2 bufs
               + 2 * 4                    # lane-dense output tile, x2 bufs
               + 6 * _HIDDEN * 4)         # wt_h/mt_h/prod/temps (f32)
    resident = 2 * 2 * D * _HIDDEN * w_bytes + (64 << 10)
    tb_cap = max(128, ((budget - resident) // max(per_row, 1)) // 128 * 128)

    if block_b is None:
        block_b = 4096 if D <= 64 else 2048
    tb = max(128, min(int(block_b), tb_cap))
    tb = max(128, (tb // 128) * 128)              # lane-dense out needs tb % 128 == 0
    tb = min(tb, _round_up(B, 128))
    if B >= 2 * 128:
        # >= 2 grid steps so both v7x TensorCores get work; one extra ~0.35 us
        # grid step on 1-TC chips is negligible at this batch size.
        tb = min(tb, _round_up(-(-B // 2), 128))
    tb = max(tb, 128)

    # Only tiny batches (B < tb) get padded — negligible cost.  For B >= tb
    # the ragged last tile is masked by Pallas (all ops are row-independent).
    if B < tb:
        pad = tb - B
        wt_x = jnp.pad(wt_x, ((0, pad), (0, 0)))
        mt_x = jnp.pad(mt_x, ((0, pad), (0, 0)))
        pos_x = jnp.pad(pos_x, ((0, pad), (0, 0)))
        b_eff = tb
    else:
        b_eff = B

    num_tiles = pl.cdiv(b_eff, tb)
    g = tb // 128

    est = resident + per_row * tb + (2 << 20)
    vmem_limit = int(min(max(2 * est, 16 << 20), int(vmem_cap * 0.9)))

    # ---- pallas_call ------------------------------------------------------
    def tiled(w):
        return pl.BlockSpec((tb, w), lambda i: (i, 0))

    def resident_spec(r, c):
        return pl.BlockSpec((r, c), lambda i: (0, 0))

    smem = pl.BlockSpec(memory_space=pltpu.MemorySpace.SMEM)

    kernel = functools.partial(_rep2mut_kernel, apply_sigmoid=apply_sigmoid)

    out = pl.pallas_call(
        kernel,
        out_shape=jax.ShapeDtypeStruct((num_tiles, g, 128), jnp.float32),
        grid=(num_tiles,),
        in_specs=[
            smem,                                          # scalars
            tiled(D), tiled(D), tiled(P),                  # wt_x, mt_x, pos_x
            resident_spec(D, _HIDDEN), resident_spec(1, _HIDDEN),   # w_wt, b_wt
            resident_spec(D, _HIDDEN), resident_spec(1, _HIDDEN),   # w_mt, b_mt
            resident_spec(1, _HIDDEN), resident_spec(1, P),         # w_out rows
        ],
        out_specs=pl.BlockSpec((1, g, 128), lambda i: (i, 0, 0)),
        compiler_params=pltpu.CompilerParams(
            dimension_semantics=("parallel",),
            vmem_limit_bytes=vmem_limit),
    )(scalars, wt_x, mt_x, pos_x,
      w_wt, b_wt, w_mt, b_mt,
      w_out_h_row, w_out_p_row)

    # Lane-dense (num_tiles, tb/128, 128) -> (B, 1); row-major order matches
    # batch order by construction.
    return out.reshape(-1, 1)[:B]


def init_params(key, input_dim, outputs=('0',)):
    """Deterministic synthetic init matching the module's shapes."""
    hidden_dim1, pos_dim, hidden_dim2 = _HIDDEN, 86, 1
    keys = jax.random.split(key, 6 + 2 * len(outputs))

    def linear(kw, kb, fan_in, fan_out):
        # Kaiming-uniform-style bound, stored pre-transposed as [in, out].
        bound = 1.0 / jnp.sqrt(float(fan_in))
        w = jax.random.uniform(kw, (fan_in, fan_out), jnp.float32, -bound, bound)
        b = jax.random.uniform(kb, (1, fan_out), jnp.float32, -bound, bound)
        return w, b

    params = {
        'wt_linear1': linear(keys[0], keys[1], input_dim, hidden_dim1),
        'mt_linear1': linear(keys[2], keys[3], input_dim, hidden_dim1),
        # PyTorch PReLU default init: alpha = 0.25 (single shared parameter)
        'prelu1_alpha': jnp.array([0.25], jnp.float32),
        'prelu2_alpha': jnp.array([0.25], jnp.float32),
        'outputs': {},
    }
    for i, e in enumerate(outputs):
        kw, kb = keys[6 + 2 * i], keys[7 + 2 * i]
        params['outputs'][e] = linear(kw, kb, hidden_dim1 + pos_dim, hidden_dim2)
    return params


def _reference_forward(wt_x, mt_x, pos_x, params, output='0'):
    """Pure-JAX reference for correctness checking."""
    w_wt, b_wt = params['wt_linear1']
    w_mt, b_mt = params['mt_linear1']
    a1 = params['prelu1_alpha'][0]
    a2 = params['prelu2_alpha'][0]
    w_out, b_out = params['outputs'][output]

    wt_h = wt_x @ w_wt + b_wt
    wt_h = jnp.where(wt_h >= 0, wt_h, a1 * wt_h)
    mt_h = mt_x @ w_mt + b_mt
    mt_h = jnp.where(mt_h >= 0, mt_h, a2 * mt_h)
    cat = jnp.concatenate([wt_h * mt_h, pos_x], axis=1)
    out = cat @ w_out + b_out
    if output == 'Tat':
        out = jax.nn.sigmoid(out)
    return out


if __name__ == "__main__":
    key = jax.random.PRNGKey(0)
    B, input_dim, pos_dim = 8, 32, 86

    k_p, k_wt, k_mt, k_pos = jax.random.split(key, 4)
    params = init_params(k_p, input_dim, outputs=('0', 'Tat'))

    wt_x = jax.random.normal(k_wt, (B, input_dim), jnp.float32)
    mt_x = jax.random.normal(k_mt, (B, input_dim), jnp.float32)
    pos_x = jax.random.normal(k_pos, (B, pos_dim), jnp.float32)

    out = jax.block_until_ready(
        rep2mut_forward(wt_x, mt_x, pos_x, params, output='0'))
    out_tat = jax.block_until_ready(
        rep2mut_forward(wt_x, mt_x, pos_x, params, output='Tat'))

    ref = _reference_forward(wt_x, mt_x, pos_x, params, output='0')
    ref_tat = _reference_forward(wt_x, mt_x, pos_x, params, output='Tat')

    assert out.shape == (B, 1) and out_tat.shape == (B, 1)
    assert jnp.allclose(out, ref, atol=1e-5, rtol=1e-5)
    assert jnp.allclose(out_tat, ref_tat, atol=1e-5, rtol=1e-5)

    # Ragged multi-tile grid: B not a multiple of tb (no batch padding; Pallas
    # masks the ragged last tile, tail rows are sliced off).
    B2 = 300
    k2w, k2m, k2p = jax.random.split(jax.random.PRNGKey(1), 3)
    wt2 = jax.random.normal(k2w, (B2, input_dim), jnp.float32)
    mt2 = jax.random.normal(k2m, (B2, input_dim), jnp.float32)
    pos2 = jax.random.normal(k2p, (B2, pos_dim), jnp.float32)
    out2 = jax.block_until_ready(
        rep2mut_forward(wt2, mt2, pos2, params, output='0', block_b=128))
    ref2 = _reference_forward(wt2, mt2, pos2, params, output='0')
    assert out2.shape == (B2, 1)
    assert jnp.allclose(out2, ref2, atol=1e-5, rtol=1e-5)

    # bf16 activations stored upstream (no wrapper-side cast): loose check.
    wt_bf = wt_x.astype(jnp.bfloat16)
    mt_bf = mt_x.astype(jnp.bfloat16)
    out_bf = jax.block_until_ready(
        rep2mut_forward(wt_bf, mt_bf, pos_x, params, output='0'))
    ref_bf = _reference_forward(wt_bf.astype(jnp.float32),
                                mt_bf.astype(jnp.float32),
                                pos_x, params, output='0')
    assert jnp.allclose(out_bf, ref_bf, atol=1e-2, rtol=1e-2)

    print("KERNEL_OK")
</pallas_src>

<mosaic_0001>
module attributes {stable_mosaic.version = 11 : i64} {
  func.func @_rep2mut_kernel(%arg0: i32, %arg1: memref<3xf32, #tpu.memory_space<smem>>, %arg2: memref<128x32xf32, #tpu.memory_space<vmem>>, %arg3: memref<128x32xf32, #tpu.memory_space<vmem>>, %arg4: memref<128x86xf32, #tpu.memory_space<vmem>>, %arg5: memref<32x128xf32, #tpu.memory_space<vmem>>, %arg6: memref<1x128xf32, #tpu.memory_space<vmem>>, %arg7: memref<32x128xf32, #tpu.memory_space<vmem>>, %arg8: memref<1x128xf32, #tpu.memory_space<vmem>>, %arg9: memref<1x128xf32, #tpu.memory_space<vmem>>, %arg10: memref<1x86xf32, #tpu.memory_space<vmem>>, %arg11: memref<1x1x128xf32, #tpu.memory_space<vmem>>) attributes {dimension_semantics = [#tpu.dimension_semantics<parallel>], iteration_bounds = array<i64: 1>, scalar_prefetch = 0 : i64, scratch_operands = 0 : i64, tpu.core_type = #tpu.core_type<tc>, window_params = [{transform_indices = @transform_0, window_bounds = array<i64: 3>}, {transform_indices = @transform_1, window_bounds = array<i64: 128, 32>}, {transform_indices = @transform_2, window_bounds = array<i64: 128, 32>}, {transform_indices = @transform_3, window_bounds = array<i64: 128, 86>}, {pipeline_mode = #tpu.pipeline_mode<synchronous>, transform_indices = @transform_4, window_bounds = array<i64: 32, 128>}, {pipeline_mode = #tpu.pipeline_mode<synchronous>, transform_indices = @transform_5, window_bounds = array<i64: 1, 128>}, {pipeline_mode = #tpu.pipeline_mode<synchronous>, transform_indices = @transform_6, window_bounds = array<i64: 32, 128>}, {pipeline_mode = #tpu.pipeline_mode<synchronous>, transform_indices = @transform_7, window_bounds = array<i64: 1, 128>}, {pipeline_mode = #tpu.pipeline_mode<synchronous>, transform_indices = @transform_8, window_bounds = array<i64: 1, 128>}, {pipeline_mode = #tpu.pipeline_mode<synchronous>, transform_indices = @transform_9, window_bounds = array<i64: 1, 86>}, {transform_indices = @transform_10, window_bounds = array<i64: 1, 1, 128>}]} {
    %c0 = arith.constant 0 : index
    %0 = memref.load %arg1[%c0] : memref<3xf32, #tpu.memory_space<smem>>
    %c1 = arith.constant 1 : index
    %1 = memref.load %arg1[%c1] : memref<3xf32, #tpu.memory_space<smem>>
    %c2 = arith.constant 2 : index
    %2 = memref.load %arg1[%c2] : memref<3xf32, #tpu.memory_space<smem>>
    %c0_0 = arith.constant 0 : index
    %c0_1 = arith.constant 0 : index
    %3 = vector.load %arg2[%c0_0, %c0_1] : memref<128x32xf32, #tpu.memory_space<vmem>>, vector<128x32xf32>
    %c0_2 = arith.constant 0 : index
    %c0_3 = arith.constant 0 : index
    %4 = vector.load %arg5[%c0_2, %c0_3] : memref<32x128xf32, #tpu.memory_space<vmem>>, vector<32x128xf32>
    %cst = arith.constant dense<0.000000e+00> : vector<128x128xf32>
    %5 = tpu.matmul %3, %4, %cst {dimension_numbers = #tpu.dot_dimension_numbers<[1], [0], [0], [1], [0, 0, 1, 1], [], []>} : vector<128x32xf32>, vector<32x128xf32>, vector<128x128xf32> -> vector<128x128xf32>
    %c0_4 = arith.constant 0 : index
    %c0_5 = arith.constant 0 : index
    %6 = vector.load %arg6[%c0_4, %c0_5] : memref<1x128xf32, #tpu.memory_space<vmem>>, vector<1x128xf32>
    %7 = vector.broadcast %6 : vector<1x128xf32> to vector<128x128xf32>
    %8 = arith.addf %5, %7 : vector<128x128xf32>
    %cst_6 = arith.constant 0.000000e+00 : f32
    %9 = vector.broadcast %cst_6 : f32 to vector<128x128xf32>
    %10 = arith.cmpf oge, %8, %9 : vector<128x128xf32>
    %11 = vector.broadcast %0 : f32 to vector<128x128xf32>
    %12 = arith.mulf %11, %8 : vector<128x128xf32>
    %13 = arith.select %10, %8, %12 : vector<128x128xi1>, vector<128x128xf32>
    %c0_7 = arith.constant 0 : index
    %c0_8 = arith.constant 0 : index
    %14 = vector.load %arg3[%c0_7, %c0_8] : memref<128x32xf32, #tpu.memory_space<vmem>>, vector<128x32xf32>
    %c0_9 = arith.constant 0 : index
    %c0_10 = arith.constant 0 : index
    %15 = vector.load %arg7[%c0_9, %c0_10] : memref<32x128xf32, #tpu.memory_space<vmem>>, vector<32x128xf32>
    %cst_11 = arith.constant dense<0.000000e+00> : vector<128x128xf32>
    %16 = tpu.matmul %14, %15, %cst_11 {dimension_numbers = #tpu.dot_dimension_numbers<[1], [0], [0], [1], [0, 0, 1, 1], [], []>} : vector<128x32xf32>, vector<32x128xf32>, vector<128x128xf32> -> vector<128x128xf32>
    %c0_12 = arith.constant 0 : index
    %c0_13 = arith.constant 0 : index
    %17 = vector.load %arg8[%c0_12, %c0_13] : memref<1x128xf32, #tpu.memory_space<vmem>>, vector<1x128xf32>
    %18 = vector.broadcast %17 : vector<1x128xf32> to vector<128x128xf32>
    %19 = arith.addf %16, %18 : vector<128x128xf32>
    %cst_14 = arith.constant 0.000000e+00 : f32
    %20 = vector.broadcast %cst_14 : f32 to vector<128x128xf32>
    %21 = arith.cmpf oge, %19, %20 : vector<128x128xf32>
    %22 = vector.broadcast %1 : f32 to vector<128x128xf32>
    %23 = arith.mulf %22, %19 : vector<128x128xf32>
    %24 = arith.select %21, %19, %23 : vector<128x128xi1>, vector<128x128xf32>
    %25 = arith.mulf %13, %24 : vector<128x128xf32>
    %c0_15 = arith.constant 0 : index
    %c0_16 = arith.constant 0 : index
    %26 = vector.load %arg4[%c0_15, %c0_16] : memref<128x86xf32, #tpu.memory_space<vmem>>, vector<128x86xf32>
    %c0_17 = arith.constant 0 : index
    %c0_18 = arith.constant 0 : index
    %27 = vector.load %arg9[%c0_17, %c0_18] : memref<1x128xf32, #tpu.memory_space<vmem>>, vector<1x128xf32>
    %28 = vector.broadcast %27 : vector<1x128xf32> to vector<128x128xf32>
    %29 = arith.mulf %25, %28 : vector<128x128xf32>
    %30 = vector.shape_cast %29 : vector<128x128xf32> to vector<1x128x128xf32>
    %c0_19 = arith.constant 0 : index
    %c0_20 = arith.constant 0 : index
    %31 = vector.load %arg10[%c0_19, %c0_20] : memref<1x86xf32, #tpu.memory_space<vmem>>, vector<1x86xf32>
    %32 = vector.broadcast %31 : vector<1x86xf32> to vector<128x86xf32>
    %33 = arith.mulf %26, %32 : vector<128x86xf32>
    %34 = vector.shape_cast %33 : vector<128x86xf32> to vector<1x128x86xf32>
    %cst_21 = arith.constant dense<0.000000e+00> : vector<1x128xf32>
    %35 = vector.multi_reduction <add>, %30, %cst_21 [2] : vector<1x128x128xf32> to vector<1x128xf32>
    %cst_22 = arith.constant dense<0.000000e+00> : vector<1x128xf32>
    %36 = vector.multi_reduction <add>, %34, %cst_22 [2] : vector<1x128x86xf32> to vector<1x128xf32>
    %37 = arith.addf %35, %36 : vector<1x128xf32>
    %38 = vector.broadcast %2 : f32 to vector<1x128xf32>
    %39 = arith.addf %37, %38 : vector<1x128xf32>
    %c0_23 = arith.constant 0 : index
    %c0_24 = arith.constant 0 : index
    %c0_25 = arith.constant 0 : index
    %40 = vector.load %arg11[%c0_23, %c0_24, %c0_25] : memref<1x1x128xf32, #tpu.memory_space<vmem>>, vector<1x1x128xf32>
    %41 = vector.shape_cast %40 : vector<1x1x128xf32> to vector<1x128xf32>
    %42 = vector.shape_cast %39 : vector<1x128xf32> to vector<1x1x128xf32>
    tpu.vector_store %arg11[%c0_23, %c0_24, %c0_25], %42 {strides = array<i32>} : memref<1x1x128xf32, #tpu.memory_space<vmem>>, vector<1x1x128xf32>,
    return
  }
  func.func @transform_0(%arg0: i32) -> i32 {
    %c0_i32 = arith.constant 0 : i32
    %c0_i32_0 = arith.constant 0 : i32
    return %c0_i32 : i32
  }
  func.func @transform_1(%arg0: i32) -> (i32, i32) {
    %c0_i32 = arith.constant 0 : i32
    %c0_i32_0 = arith.constant 0 : i32
    return %arg0, %c0_i32 : i32, i32
  }
  func.func @transform_2(%arg0: i32) -> (i32, i32) {
    %c0_i32 = arith.constant 0 : i32
    %c0_i32_0 = arith.constant 0 : i32
    return %arg0, %c0_i32 : i32, i32
  }
  func.func @transform_3(%arg0: i32) -> (i32, i32) {
    %c0_i32 = arith.constant 0 : i32
    %c0_i32_0 = arith.constant 0 : i32
    return %arg0, %c0_i32 : i32, i32
  }
  func.func @transform_4(%arg0: i32) -> (i32, i32) {
    %c0_i32 = arith.constant 0 : i32
    %c0_i32_0 = arith.constant 0 : i32
    %c0_i32_1 = arith.constant 0 : i32
    return %c0_i32, %c0_i32_0 : i32, i32
  }
  func.func @transform_5(%arg0: i32) -> (i32, i32) {
    %c0_i32 = arith.constant 0 : i32
    %c0_i32_0 = arith.constant 0 : i32
    %c0_i32_1 = arith.constant 0 : i32
    return %c0_i32, %c0_i32_0 : i32, i32
  }
  func.func @transform_6(%arg0: i32) -> (i32, i32) {
    %c0_i32 = arith.constant 0 : i32
    %c0_i32_0 = arith.constant 0 : i32
    %c0_i32_1 = arith.constant 0 : i32
    return %c0_i32, %c0_i32_0 : i32, i32
  }
  func.func @transform_7(%arg0: i32) -> (i32, i32) {
    %c0_i32 = arith.constant 0 : i32
    %c0_i32_0 = arith.constant 0 : i32
    %c0_i32_1 = arith.constant 0 : i32
    return %c0_i32, %c0_i32_0 : i32, i32
  }
  func.func @transform_8(%arg0: i32) -> (i32, i32) {
    %c0_i32 = arith.constant 0 : i32
    %c0_i32_0 = arith.constant 0 : i32
    %c0_i32_1 = arith.constant 0 : i32
    return %c0_i32, %c0_i32_0 : i32, i32
  }
  func.func @transform_9(%arg0: i32) -> (i32, i32) {
    %c0_i32 = arith.constant 0 : i32
    %c0_i32_0 = arith.constant 0 : i32
    %c0_i32_1 = arith.constant 0 : i32
    return %c0_i32, %c0_i32_0 : i32, i32
  }
  func.func @transform_10(%arg0: i32) -> (i32, i32, i32) {
    %c0_i32 = arith.constant 0 : i32
    %c0_i32_0 = arith.constant 0 : i32
    %c0_i32_1 = arith.constant 0 : i32
    return %arg0, %c0_i32, %c0_i32_0 : i32, i32, i32
  }
}

</mosaic_0001>

<llo_original>
// kernel: tpu_custom_call.1
$region0: #{tpu_custom_call.1}
  #allocation0 [shape = 'u32[]', space=smem, size = 0x4, offset = 0x4, fixed_abs, tag = 'smem constant byte address 0x4 - core index']
  #allocation1 [shape = 'u32[144,128]{1,0:T(1,128)}', space=vmem, size = 0x12000, scoped, tag = 'internal scratch']
  %s0 = inlined_call_operand.vmem [shape: f32[3], index: 0, kind: input, shape index: {}]
  %s1 = inlined_call_operand.vmem [shape: f32[128,32], index: 1, kind: input, shape index: {}]
  %s2 = inlined_call_operand.vmem [shape: f32[128,32], index: 2, kind: input, shape index: {}]
  %s3 = inlined_call_operand.vmem [shape: f32[128,86], index: 3, kind: input, shape index: {}]
  %s4 = inlined_call_operand.vmem [shape: f32[32,128], index: 4, kind: input, shape index: {}]
  %s5 = inlined_call_operand.vmem [shape: f32[1,128], index: 5, kind: input, shape index: {}]
  %s6 = inlined_call_operand.vmem [shape: f32[32,128], index: 6, kind: input, shape index: {}]
  %s7 = inlined_call_operand.vmem [shape: f32[1,128], index: 7, kind: input, shape index: {}]
  %s8 = inlined_call_operand.vmem [shape: f32[1,128], index: 8, kind: input, shape index: {}]
  %s9 = inlined_call_operand.vmem [shape: f32[1,86], index: 9, kind: input, shape index: {}]
  %s10 = inlined_call_operand.hbm [shape: f32[1,1,128], index: 10, kind: output, shape index: {}]
  %s11 = sld [smem:[#allocation0]]
  $region54: #{tpu_custom_call.1} parent=0
    _
  %s13 = ssub.s32 1, %s11
  %s14 = scalar_select 0, %s13, %s11
  $region1: #{tpu_custom_call.1} parent=0
    #allocation2 [shape = 'u8[512]{0}', space=smem, size = 0x200, scoped, tag = 'input window, operand 0, single buffered']
    #allocation3 [shape = 's32[1]{0}', space=sflag, size = 0x4, scoped, tag = 'scoped memory for tpu_custom_call.1']
    #allocation4 [shape = 's32[1]{0}', space=sflag, size = 0x4, scoped, tag = 'scoped memory for tpu_custom_call.1']
    #allocation5 [shape = 'u8[512]{0}', space=vmem, size = 0x400, scoped, tag = 'output window, operand 0, single buffered']
    %15 = vsyncpa [#allocation4], 0
    %16 = vsyncpa [#allocation3], 0
    // Predicated region
    $region2: #{tpu_custom_call.1} parent=1 // pred_check
      _
    $region3: #{tpu_custom_call.1} parent=1 // pred_check_branch
      %18 = sbr.rel (0) target = $region5
    $region4: #{tpu_custom_call.1} parent=1 // pred_region
      %s20 = ssub.s32 16, 16
      %21 = vsyncadd [#allocation4], %s20
      %s23 = sshll.u32 %s0, 4
      %s24 = int_to_ptr.vmem [resolvable:$true] %s23
      %26 = dma.vmem_to_smem %s24, 16, [#allocation2], [#allocation4]
    $region5: #{tpu_custom_call.1} parent=1 // pred_fallthru
      _
    // Predicated region
    $region6: #{tpu_custom_call.1} parent=1 // pred_check
      _
    $region7: #{tpu_custom_call.1} parent=1 // pred_check_branch
      %28 = sbr.rel (0) target = $region9
    $region8: #{tpu_custom_call.1} parent=1 // pred_region
      _
    $region9: #{tpu_custom_call.1} parent=1 // pred_fallthru
      _
    // Predicated region
    $region10: #{tpu_custom_call.1} parent=1 // pred_check
      _
    $region11: #{tpu_custom_call.1} parent=1 // pred_check_branch
      %30 = sbr.rel (0) target = $region13
    $region12: #{tpu_custom_call.1} parent=1 // pred_region
      _
    $region13: #{tpu_custom_call.1} parent=1 // pred_fallthru
      _
    // Predicated region
    $region14: #{tpu_custom_call.1} parent=1 // pred_check
      _
    $region15: #{tpu_custom_call.1} parent=1 // pred_check_branch
      %32 = sbr.rel (0) target = $region17
    $region16: #{tpu_custom_call.1} parent=1 // pred_region
      _
    $region17: #{tpu_custom_call.1} parent=1 // pred_fallthru
      _
    // Predicated region
    $region18: #{tpu_custom_call.1} parent=1 // pred_check
      _
    $region19: #{tpu_custom_call.1} parent=1 // pred_check_branch
      %34 = sbr.rel (0) target = $region21
    $region20: #{tpu_custom_call.1} parent=1 // pred_region
      _
    $region21: #{tpu_custom_call.1} parent=1 // pred_fallthru
      _
    // Predicated region
    $region22: #{tpu_custom_call.1} parent=1 // pred_check
      _
    $region23: #{tpu_custom_call.1} parent=1 // pred_check_branch
      %36 = sbr.rel (0) target = $region25
    $region24: #{tpu_custom_call.1} parent=1 // pred_region
      _
    $region25: #{tpu_custom_call.1} parent=1 // pred_fallthru
      _
    // Predicated region
    $region26: #{tpu_custom_call.1} parent=1 // pred_check
      _
    $region27: #{tpu_custom_call.1} parent=1 // pred_check_branch
      %38 = sbr.rel (0) target = $region29
    $region28: #{tpu_custom_call.1} parent=1 // pred_region
      _
    $region29: #{tpu_custom_call.1} parent=1 // pred_fallthru
      _
    // Predicated region
    $region30: #{tpu_custom_call.1} parent=1 // pred_check
      _
    $region31: #{tpu_custom_call.1} parent=1 // pred_check_branch
      %40 = sbr.rel (0) target = $region33
    $region32: #{tpu_custom_call.1} parent=1 // pred_region
      _
    $region33: #{tpu_custom_call.1} parent=1 // pred_fallthru
      _
    // Predicated region
    $region34: #{tpu_custom_call.1} parent=1 // pred_check
      _
    $region35: #{tpu_custom_call.1} parent=1 // pred_check_branch
      %42 = sbr.rel (0) target = $region37
    $region36: #{tpu_custom_call.1} parent=1 // pred_region
      _
    $region37: #{tpu_custom_call.1} parent=1 // pred_fallthru
      _
    // Predicated region
    $region38: #{tpu_custom_call.1} parent=1 // pred_check
      _
    $region39: #{tpu_custom_call.1} parent=1 // pred_check_branch
      %44 = sbr.rel (0) target = $region41
    $region40: #{tpu_custom_call.1} parent=1 // pred_region
      _
    $region41: #{tpu_custom_call.1} parent=1 // pred_fallthru
      _
    // Predicated region
    $region42: #{tpu_custom_call.1} parent=1 // pred_check
      _
    $region43: #{tpu_custom_call.1} parent=1 // pred_check_branch
      %46 = sbr.rel (0) target = $region45
    $region44: #{tpu_custom_call.1} parent=1 // pred_region
      %47 = dma.done [#allocation4], 16
    $region45: #{tpu_custom_call.1} parent=1 // pred_fallthru
      _
    %48 = sfence
    %s49 = sld [smem:[#allocation2]]
    %s50 = sld [smem:[#allocation2 + $0x1]]
    %s51 = sld [smem:[#allocation2 + $0x2]]
    %v52 = vld [vmem:[%s1] sm:$0xff]
    %v53 = vld [vmem:[%s1 + $0x8] sm:$0xff]
    %v54 = vld [vmem:[%s1 + $0x10] sm:$0xff]
    %v55 = vld [vmem:[%s1 + $0x18] sm:$0xff]
    %v56 = vld [vmem:[%s1 + $0x20] sm:$0xff]
    %v57 = vld [vmem:[%s1 + $0x28] sm:$0xff]
    %v58 = vld [vmem:[%s1 + $0x30] sm:$0xff]
    %v59 = vld [vmem:[%s1 + $0x38] sm:$0xff]
    %v60 = vld [vmem:[%s1 + $0x40] sm:$0xff]
    %v61 = vld [vmem:[%s1 + $0x48] sm:$0xff]
    %v62 = vld [vmem:[%s1 + $0x50] sm:$0xff]
    %v63 = vld [vmem:[%s1 + $0x58] sm:$0xff]
    %v64 = vld [vmem:[%s1 + $0x60] sm:$0xff]
    %v65 = vld [vmem:[%s1 + $0x68] sm:$0xff]
    %v66 = vld [vmem:[%s1 + $0x70] sm:$0xff]
    %v67 = vld [vmem:[%s1 + $0x78] sm:$0xff]
    %v68 = vld [vmem:[%s4] sm:$0xff]
    %v69 = vld [vmem:[%s4 + $0x8] sm:$0xff]
    %v70 = vld [vmem:[%s4 + $0x10] sm:$0xff]
    %v71 = vld [vmem:[%s4 + $0x18] sm:$0xff]
    %v72 = vld [vmem:[%s5] sm:$0x1]
    %v74 = vlaneseq
    %v75 = vshrl.u32 %v74, 7
    %v76 = vsub.s32 0, %v75
    %v77 = vrot.slane %v72, %v76
    %vm79 = vcmask 261120
    %v81 = vsel %vm79, %v52, 0
    %v84 = vsel %vm79, %v53, 0
    %v87 = vsel %vm79, %v54, 0
    %v90 = vsel %vm79, %v55, 0
    %v93 = vsel %vm79, %v56, 0
    %v96 = vsel %vm79, %v57, 0
    %v99 = vsel %vm79, %v58, 0
    %v102 = vsel %vm79, %v59, 0
    %v105 = vsel %vm79, %v60, 0
    %v108 = vsel %vm79, %v61, 0
    %v111 = vsel %vm79, %v62, 0
    %v114 = vsel %vm79, %v63, 0
    %v117 = vsel %vm79, %v64, 0
    %v120 = vsel %vm79, %v65, 0
    %v123 = vsel %vm79, %v66, 0
    %v126 = vsel %vm79, %v67, 0
    %128 = vmatprep.subr.mxu0 0.0
    %129 = vmatpush1.msra.mxu0 %v68
    %130 = vmatprep.subr.mxu0 0.0
    %131 = vmatpush1.msra.mxu0 %v69
    %132 = vmatprep.subr.mxu0 0.0
    %133 = vmatpush1.msra.mxu0 %v70
    %134 = vmatprep.subr.mxu0 0.0
    %135 = vmatpush1.msra.mxu0 %v71
    %136 = vmatprep.subr.mxu0 0.0
    %137 = vmatpush1.msra.mxu0 0.0
    %138 = vmatprep.subr.mxu0 0.0
    %139 = vmatpush1.msra.mxu0 0.0
    %140 = vmatprep.subr.mxu0 0.0
    %141 = vmatpush1.msra.mxu0 0.0
    %142 = vmatprep.subr.mxu0 0.0
    %143 = vmatpush1.msra.mxu0 0.0
    %144 = vmatprep.subr.mxu0 0.0
    %145 = vmatpush1.msra.mxu0 0.0
    %146 = vmatprep.subr.mxu0 0.0
    %147 = vmatpush1.msra.mxu0 0.0
    %148 = vmatprep.subr.mxu0 0.0
    %149 = vmatpush1.msra.mxu0 0.0
    %150 = vmatprep.subr.mxu0 0.0
    %151 = vmatpush1.msra.mxu0 0.0
    %152 = vmatprep.subr.mxu0 0.0
    %153 = vmatpush1.msra.mxu0 0.0
    %154 = vmatprep.subr.mxu0 0.0
    %155 = vmatpush1.msra.mxu0 0.0
    %156 = vmatprep.subr.mxu0 0.0
    %157 = vmatpush1.msra.mxu0 0.0
    %158 = vmatprep.subr.mxu0 0.0
    %159 = vmatpush1.msra.mxu0 0.0
    %160 = vmatprep.subr.mxu0 0.0
    %161 = vmatpush1.msra.mxu0 0.0
    %162 = vmatprep.subr.mxu0 0.0
    %163 = vmatpush1.msra.mxu0 0.0
    %164 = vmatprep.subr.mxu0 0.0
    %165 = vmatpush1.msra.mxu0 0.0
    %166 = vmatprep.subr.mxu0 0.0
    %167 = vmatpush1.msra.mxu0 0.0
    %168 = vmatprep.subr.mxu0 0.0
    %169 = vmatpush1.msra.mxu0 0.0
    %170 = vmatprep.subr.mxu0 0.0
    %171 = vmatpush1.msra.mxu0 0.0
    %172 = vmatprep.subr.mxu0 0.0
    %173 = vmatpush1.msra.mxu0 0.0
    %174 = vmatprep.subr.mxu0 0.0
    %175 = vmatpush1.msra.mxu0 0.0
    %176 = vmatprep.subr.mxu0 0.0
    %177 = vmatpush1.msra.mxu0 0.0
    %178 = vmatprep.subr.mxu0 0.0
    %179 = vmatpush1.msra.mxu0 0.0
    %180 = vmatprep.subr.mxu0 0.0
    %181 = vmatpush1.msra.mxu0 0.0
    %182 = vmatprep.subr.mxu0 0.0
    %183 = vmatpush1.msra.mxu0 0.0
    %184 = vmatprep.subr.mxu0 0.0
    %185 = vmatpush1.msra.mxu0 0.0
    %186 = vmatprep.subr.mxu0 0.0
    %187 = vmatpush1.msra.mxu0 0.0
    %188 = vmatprep.subr.mxu0 0.0
    %189 = vmatpush1.msra.mxu0 0.0
    %190 = vmatprep.subr.mxu0 0.0
    %191 = vmatpush1.msra.mxu0 0.0
    %192 = vmatprep.mubr.f32.mxu0 0.0
    %193 = vmatmul.mubr.f32.gmra.mrb[0].mxu0 %v81
    %v194 = vpop.f32.mrb[0].mxu0
    %v195 = vadd.f32 %v77, %v194
    %v196 = vpop.f32.mrb[0].mxu0
    %197 = vmatprep.mubr.f32.mxu0 0.0
    %198 = vmatmul.mubr.f32.gmra.mrb[0].mxu0 %v84
    %v199 = vpop.f32.mrb[0].mxu0
    %v200 = vadd.f32 %v77, %v199
    %v201 = vpop.f32.mrb[0].mxu0
    %202 = vmatprep.mubr.f32.mxu0 0.0
    %203 = vmatmul.mubr.f32.gmra.mrb[0].mxu0 %v87
    %v204 = vpop.f32.mrb[0].mxu0
    %v205 = vadd.f32 %v77, %v204
    %v206 = vpop.f32.mrb[0].mxu0
    %207 = vmatprep.mubr.f32.mxu0 0.0
    %208 = vmatmul.mubr.f32.gmra.mrb[0].mxu0 %v90
    %v209 = vpop.f32.mrb[0].mxu0
    %v210 = vadd.f32 %v77, %v209
    %v211 = vpop.f32.mrb[0].mxu0
    %212 = vmatprep.mubr.f32.mxu0 0.0
    %213 = vmatmul.mubr.f32.gmra.mrb[0].mxu0 %v93
    %v214 = vpop.f32.mrb[0].mxu0
    %v215 = vadd.f32 %v77, %v214
    %v216 = vpop.f32.mrb[0].mxu0
    %217 = vmatprep.mubr.f32.mxu0 0.0
    %218 = vmatmul.mubr.f32.gmra.mrb[0].mxu0 %v96
    %v219 = vpop.f32.mrb[0].mxu0
    %v220 = vadd.f32 %v77, %v219
    %v221 = vpop.f32.mrb[0].mxu0
    %222 = vmatprep.mubr.f32.mxu0 0.0
    %223 = vmatmul.mubr.f32.gmra.mrb[0].mxu0 %v99
    %v224 = vpop.f32.mrb[0].mxu0
    %v225 = vadd.f32 %v77, %v224
    %v226 = vpop.f32.mrb[0].mxu0
    %227 = vmatprep.mubr.f32.mxu0 0.0
    %228 = vmatmul.mubr.f32.gmra.mrb[0].mxu0 %v102
    %v229 = vpop.f32.mrb[0].mxu0
    %v230 = vadd.f32 %v77, %v229
    %v231 = vpop.f32.mrb[0].mxu0
    %232 = vmatprep.mubr.f32.mxu0 0.0
    %233 = vmatmul.mubr.f32.gmra.mrb[0].mxu0 %v105
    %v234 = vpop.f32.mrb[0].mxu0
    %v235 = vadd.f32 %v77, %v234
    %v236 = vpop.f32.mrb[0].mxu0
    %237 = vmatprep.mubr.f32.mxu0 0.0
    %238 = vmatmul.mubr.f32.gmra.mrb[0].mxu0 %v108
    %v239 = vpop.f32.mrb[0].mxu0
    %v240 = vadd.f32 %v77, %v239
    %v241 = vpop.f32.mrb[0].mxu0
    %242 = vmatprep.mubr.f32.mxu0 0.0
    %243 = vmatmul.mubr.f32.gmra.mrb[0].mxu0 %v111
    %v244 = vpop.f32.mrb[0].mxu0
    %v245 = vadd.f32 %v77, %v244
    %v246 = vpop.f32.mrb[0].mxu0
    %247 = vmatprep.mubr.f32.mxu0 0.0
    %248 = vmatmul.mubr.f32.gmra.mrb[0].mxu0 %v114
    %v249 = vpop.f32.mrb[0].mxu0
    %v250 = vadd.f32 %v77, %v249
    %v251 = vpop.f32.mrb[0].mxu0
    %252 = vmatprep.mubr.f32.mxu0 0.0
    %253 = vmatmul.mubr.f32.gmra.mrb[0].mxu0 %v117
    %v254 = vpop.f32.mrb[0].mxu0
    %v255 = vadd.f32 %v77, %v254
    %v256 = vpop.f32.mrb[0].mxu0
    %257 = vmatprep.mubr.f32.mxu0 0.0
    %258 = vmatmul.mubr.f32.gmra.mrb[0].mxu0 %v120
    %v259 = vpop.f32.mrb[0].mxu0
    %v260 = vadd.f32 %v77, %v259
    %v261 = vpop.f32.mrb[0].mxu0
    %262 = vmatprep.mubr.f32.mxu0 0.0
    %263 = vmatmul.mubr.f32.gmra.mrb[0].mxu0 %v123
    %v264 = vpop.f32.mrb[0].mxu0
    %v265 = vadd.f32 %v77, %v264
    %v266 = vpop.f32.mrb[0].mxu0
    %267 = vmatprep.mubr.f32.mxu0 0.0
    %268 = vmatmul.mubr.f32.gmra.mrb[0].mxu0 %v126
    %v269 = vpop.f32.mrb[0].mxu0
    %v270 = vadd.f32 %v77, %v269
    %v271 = vpop.f32.mrb[0].mxu0
    %272 = vdwg.mxu0
    %vm273 = vcmp.ge.f32.partialorder %v195, 0.0
    %vm274 = vcmp.ge.f32.partialorder %v200, 0.0
    %vm275 = vcmp.ge.f32.partialorder %v205, 0.0
    %vm276 = vcmp.ge.f32.partialorder %v210, 0.0
    %vm277 = vcmp.ge.f32.partialorder %v215, 0.0
    %vm278 = vcmp.ge.f32.partialorder %v220, 0.0
    %vm279 = vcmp.ge.f32.partialorder %v225, 0.0
    %vm280 = vcmp.ge.f32.partialorder %v230, 0.0
    %vm281 = vcmp.ge.f32.partialorder %v235, 0.0
    %vm282 = vcmp.ge.f32.partialorder %v240, 0.0
    %vm283 = vcmp.ge.f32.partialorder %v245, 0.0
    %vm284 = vcmp.ge.f32.partialorder %v250, 0.0
    %vm285 = vcmp.ge.f32.partialorder %v255, 0.0
    %vm286 = vcmp.ge.f32.partialorder %v260, 0.0
    %vm287 = vcmp.ge.f32.partialorder %v265, 0.0
    %vm288 = vcmp.ge.f32.partialorder %v270, 0.0
    %v289 = vstv %s49
    %v290 = vmul.f32 %v289, %v195
    %v291 = vmul.f32 %v289, %v200
    %v292 = vmul.f32 %v289, %v205
    %v293 = vmul.f32 %v289, %v210
    %v294 = vmul.f32 %v289, %v215
    %v295 = vmul.f32 %v289, %v220
    %v296 = vmul.f32 %v289, %v225
    %v297 = vmul.f32 %v289, %v230
    %v298 = vmul.f32 %v289, %v235
    %v299 = vmul.f32 %v289, %v240
    %v300 = vmul.f32 %v289, %v245
    %v301 = vmul.f32 %v289, %v250
    %v302 = vmul.f32 %v289, %v255
    %v303 = vmul.f32 %v289, %v260
    %v304 = vmul.f32 %v289, %v265
    %v305 = vmul.f32 %v289, %v270
    %v306 = vsel %vm273, %v195, %v290
    %v307 = vsel %vm274, %v200, %v291
    %v308 = vsel %vm275, %v205, %v292
    %v309 = vsel %vm276, %v210, %v293
    %v310 = vsel %vm277, %v215, %v294
    %v311 = vsel %vm278, %v220, %v295
    %v312 = vsel %vm279, %v225, %v296
    %v313 = vsel %vm280, %v230, %v297
    %v314 = vsel %vm281, %v235, %v298
    %v315 = vsel %vm282, %v240, %v299
    %v316 = vsel %vm283, %v245, %v300
    %v317 = vsel %vm284, %v250, %v301
    %v318 = vsel %vm285, %v255, %v302
    %v319 = vsel %vm286, %v260, %v303
    %v320 = vsel %vm287, %v265, %v304
    %v321 = vsel %vm288, %v270, %v305
    %v322 = vld [vmem:[%s2] sm:$0xff]
    %v323 = vld [vmem:[%s2 + $0x8] sm:$0xff]
    %v324 = vld [vmem:[%s2 + $0x10] sm:$0xff]
    %v325 = vld [vmem:[%s2 + $0x18] sm:$0xff]
    %v326 = vld [vmem:[%s2 + $0x20] sm:$0xff]
    %v327 = vld [vmem:[%s2 + $0x28] sm:$0xff]
    %v328 = vld [vmem:[%s2 + $0x30] sm:$0xff]
    %v329 = vld [vmem:[%s2 + $0x38] sm:$0xff]
    %v330 = vld [vmem:[%s2 + $0x40] sm:$0xff]
    %v331 = vld [vmem:[%s2 + $0x48] sm:$0xff]
    %v332 = vld [vmem:[%s2 + $0x50] sm:$0xff]
    %v333 = vld [vmem:[%s2 + $0x58] sm:$0xff]
    %v334 = vld [vmem:[%s2 + $0x60] sm:$0xff]
    %v335 = vld [vmem:[%s2 + $0x68] sm:$0xff]
    %v336 = vld [vmem:[%s2 + $0x70] sm:$0xff]
    %v337 = vld [vmem:[%s2 + $0x78] sm:$0xff]
    %v338 = vld [vmem:[%s6] sm:$0xff]
    %v339 = vld [vmem:[%s6 + $0x8] sm:$0xff]
    %v340 = vld [vmem:[%s6 + $0x10] sm:$0xff]
    %v341 = vld [vmem:[%s6 + $0x18] sm:$0xff]
    %v342 = vld [vmem:[%s7] sm:$0x1]
    %v344 = vlaneseq
    %v345 = vshrl.u32 %v344, 7
    %v346 = vsub.s32 0, %v345
    %v347 = vrot.slane %v342, %v346
    %v350 = vsel %vm79, %v322, 0
    %v353 = vsel %vm79, %v323, 0
    %v356 = vsel %vm79, %v324, 0
    %v359 = vsel %vm79, %v325, 0
    %v362 = vsel %vm79, %v326, 0
    %v365 = vsel %vm79, %v327, 0
    %v368 = vsel %vm79, %v328, 0
    %v371 = vsel %vm79, %v329, 0
    %v374 = vsel %vm79, %v330, 0
    %v377 = vsel %vm79, %v331, 0
    %v380 = vsel %vm79, %v332, 0
    %v383 = vsel %vm79, %v333, 0
    %v386 = vsel %vm79, %v334, 0
    %v389 = vsel %vm79, %v335, 0
    %v392 = vsel %vm79, %v336, 0
    %v395 = vsel %vm79, %v337, 0
    %397 = vmatprep.subr.mxu0 0.0
    %398 = vmatpush1.msra.mxu0 %v338
    %399 = vmatprep.subr.mxu0 0.0
    %400 = vmatpush1.msra.mxu0 %v339
    %401 = vmatprep.subr.mxu0 0.0
    %402 = vmatpush1.msra.mxu0 %v340
    %403 = vmatprep.subr.mxu0 0.0
    %404 = vmatpush1.msra.mxu0 %v341
    %405 = vmatprep.subr.mxu0 0.0
    %406 = vmatpush1.msra.mxu0 0.0
    %407 = vmatprep.subr.mxu0 0.0
    %408 = vmatpush1.msra.mxu0 0.0
    %409 = vmatprep.subr.mxu0 0.0
    %410 = vmatpush1.msra.mxu0 0.0
    %411 = vmatprep.subr.mxu0 0.0
    %412 = vmatpush1.msra.mxu0 0.0
    %413 = vmatprep.subr.mxu0 0.0
    %414 = vmatpush1.msra.mxu0 0.0
    %415 = vmatprep.subr.mxu0 0.0
    %416 = vmatpush1.msra.mxu0 0.0
    %417 = vmatprep.subr.mxu0 0.0
    %418 = vmatpush1.msra.mxu0 0.0
    %419 = vmatprep.subr.mxu0 0.0
    %420 = vmatpush1.msra.mxu0 0.0
    %421 = vmatprep.subr.mxu0 0.0
    %422 = vmatpush1.msra.mxu0 0.0
    %423 = vmatprep.subr.mxu0 0.0
    %424 = vmatpush1.msra.mxu0 0.0
    %425 = vmatprep.subr.mxu0 0.0
    %426 = vmatpush1.msra.mxu0 0.0
    %427 = vmatprep.subr.mxu0 0.0
    %428 = vmatpush1.msra.mxu0 0.0
    %429 = vmatprep.subr.mxu0 0.0
    %430 = vmatpush1.msra.mxu0 0.0
    %431 = vmatprep.subr.mxu0 0.0
    %432 = vmatpush1.msra.mxu0 0.0
    %433 = vmatprep.subr.mxu0 0.0
    %434 = vmatpush1.msra.mxu0 0.0
    %435 = vmatprep.subr.mxu0 0.0
    %436 = vmatpush1.msra.mxu0 0.0
    %437 = vmatprep.subr.mxu0 0.0
    %438 = vmatpush1.msra.mxu0 0.0
    %439 = vmatprep.subr.mxu0 0.0
    %440 = vmatpush1.msra.mxu0 0.0
    %441 = vmatprep.subr.mxu0 0.0
    %442 = vmatpush1.msra.mxu0 0.0
    %443 = vmatprep.subr.mxu0 0.0
    %444 = vmatpush1.msra.mxu0 0.0
    %445 = vmatprep.subr.mxu0 0.0
    %446 = vmatpush1.msra.mxu0 0.0
    %447 = vmatprep.subr.mxu0 0.0
    %448 = vmatpush1.msra.mxu0 0.0
    %449 = vmatprep.subr.mxu0 0.0
    %450 = vmatpush1.msra.mxu0 0.0
    %451 = vmatprep.subr.mxu0 0.0
    %452 = vmatpush1.msra.mxu0 0.0
    %453 = vmatprep.subr.mxu0 0.0
    %454 = vmatpush1.msra.mxu0 0.0
    %455 = vmatprep.subr.mxu0 0.0
    %456 = vmatpush1.msra.mxu0 0.0
    %457 = vmatprep.subr.mxu0 0.0
    %458 = vmatpush1.msra.mxu0 0.0
    %459 = vmatprep.subr.mxu0 0.0
    %460 = vmatpush1.msra.mxu0 0.0
    %461 = vmatprep.mubr.f32.mxu0 0.0
    %462 = vmatmul.mubr.f32.gmra.mrb[0].mxu0 %v350
    %v463 = vpop.f32.mrb[0].mxu0
    %v464 = vadd.f32 %v347, %v463
    %v465 = vpop.f32.mrb[0].mxu0
    %466 = vmatprep.mubr.f32.mxu0 0.0
    %467 = vmatmul.mubr.f32.gmra.mrb[0].mxu0 %v353
    %v468 = vpop.f32.mrb[0].mxu0
    %v469 = vadd.f32 %v347, %v468
    %v470 = vpop.f32.mrb[0].mxu0
    %471 = vmatprep.mubr.f32.mxu0 0.0
    %472 = vmatmul.mubr.f32.gmra.mrb[0].mxu0 %v356
    %v473 = vpop.f32.mrb[0].mxu0
    %v474 = vadd.f32 %v347, %v473
    %v475 = vpop.f32.mrb[0].mxu0
    %476 = vmatprep.mubr.f32.mxu0 0.0
    %477 = vmatmul.mubr.f32.gmra.mrb[0].mxu0 %v359
    %v478 = vpop.f32.mrb[0].mxu0
    %v479 = vadd.f32 %v347, %v478
    %v480 = vpop.f32.mrb[0].mxu0
    %481 = vmatprep.mubr.f32.mxu0 0.0
    %482 = vmatmul.mubr.f32.gmra.mrb[0].mxu0 %v362
    %v483 = vpop.f32.mrb[0].mxu0
    %v484 = vadd.f32 %v347, %v483
    %v485 = vpop.f32.mrb[0].mxu0
    %486 = vmatprep.mubr.f32.mxu0 0.0
    %487 = vmatmul.mubr.f32.gmra.mrb[0].mxu0 %v365
    %v488 = vpop.f32.mrb[0].mxu0
    %v489 = vadd.f32 %v347, %v488
    %v490 = vpop.f32.mrb[0].mxu0
    %491 = vmatprep.mubr.f32.mxu0 0.0
    %492 = vmatmul.mubr.f32.gmra.mrb[0].mxu0 %v368
    %v493 = vpop.f32.mrb[0].mxu0
    %v494 = vadd.f32 %v347, %v493
    %v495 = vpop.f32.mrb[0].mxu0
    %496 = vmatprep.mubr.f32.mxu0 0.0
    %497 = vmatmul.mubr.f32.gmra.mrb[0].mxu0 %v371
    %v498 = vpop.f32.mrb[0].mxu0
    %v499 = vadd.f32 %v347, %v498
    %v500 = vpop.f32.mrb[0].mxu0
    %501 = vmatprep.mubr.f32.mxu0 0.0
    %502 = vmatmul.mubr.f32.gmra.mrb[0].mxu0 %v374
    %v503 = vpop.f32.mrb[0].mxu0
    %v504 = vadd.f32 %v347, %v503
    %v505 = vpop.f32.mrb[0].mxu0
    %506 = vmatprep.mubr.f32.mxu0 0.0
    %507 = vmatmul.mubr.f32.gmra.mrb[0].mxu0 %v377
    %v508 = vpop.f32.mrb[0].mxu0
    %v509 = vadd.f32 %v347, %v508
    %v510 = vpop.f32.mrb[0].mxu0
    %511 = vmatprep.mubr.f32.mxu0 0.0
    %512 = vmatmul.mubr.f32.gmra.mrb[0].mxu0 %v380
    %v513 = vpop.f32.mrb[0].mxu0
    %v514 = vadd.f32 %v347, %v513
    %v515 = vpop.f32.mrb[0].mxu0
    %516 = vmatprep.mubr.f32.mxu0 0.0
    %517 = vmatmul.mubr.f32.gmra.mrb[0].mxu0 %v383
    %v518 = vpop.f32.mrb[0].mxu0
    %v519 = vadd.f32 %v347, %v518
    %v520 = vpop.f32.mrb[0].mxu0
    %521 = vmatprep.mubr.f32.mxu0 0.0
    %522 = vmatmul.mubr.f32.gmra.mrb[0].mxu0 %v386
    %v523 = vpop.f32.mrb[0].mxu0
    %v524 = vadd.f32 %v347, %v523
    %v525 = vpop.f32.mrb[0].mxu0
    %526 = vmatprep.mubr.f32.mxu0 0.0
    %527 = vmatmul.mubr.f32.gmra.mrb[0].mxu0 %v389
    %v528 = vpop.f32.mrb[0].mxu0
    %v529 = vadd.f32 %v347, %v528
    %v530 = vpop.f32.mrb[0].mxu0
    %531 = vmatprep.mubr.f32.mxu0 0.0
    %532 = vmatmul.mubr.f32.gmra.mrb[0].mxu0 %v392
    %v533 = vpop.f32.mrb[0].mxu0
    %v534 = vadd.f32 %v347, %v533
    %v535 = vpop.f32.mrb[0].mxu0
    %536 = vmatprep.mubr.f32.mxu0 0.0
    %537 = vmatmul.mubr.f32.gmra.mrb[0].mxu0 %v395
    %v538 = vpop.f32.mrb[0].mxu0
    %v539 = vadd.f32 %v347, %v538
    %v540 = vpop.f32.mrb[0].mxu0
    %541 = vdwg.mxu0
    %vm542 = vcmp.ge.f32.partialorder %v464, 0.0
    %vm543 = vcmp.ge.f32.partialorder %v469, 0.0
    %vm544 = vcmp.ge.f32.partialorder %v474, 0.0
    %vm545 = vcmp.ge.f32.partialorder %v479, 0.0
    %vm546 = vcmp.ge.f32.partialorder %v484, 0.0
    %vm547 = vcmp.ge.f32.partialorder %v489, 0.0
    %vm548 = vcmp.ge.f32.partialorder %v494, 0.0
    %vm549 = vcmp.ge.f32.partialorder %v499, 0.0
    %vm550 = vcmp.ge.f32.partialorder %v504, 0.0
    %vm551 = vcmp.ge.f32.partialorder %v509, 0.0
    %vm552 = vcmp.ge.f32.partialorder %v514, 0.0
    %vm553 = vcmp.ge.f32.partialorder %v519, 0.0
    %vm554 = vcmp.ge.f32.partialorder %v524, 0.0
    %vm555 = vcmp.ge.f32.partialorder %v529, 0.0
    %vm556 = vcmp.ge.f32.partialorder %v534, 0.0
    %vm557 = vcmp.ge.f32.partialorder %v539, 0.0
    %v558 = vstv %s50
    %v559 = vmul.f32 %v558, %v464
    %v560 = vmul.f32 %v558, %v469
    %v561 = vmul.f32 %v558, %v474
    %v562 = vmul.f32 %v558, %v479
    %v563 = vmul.f32 %v558, %v484
    %v564 = vmul.f32 %v558, %v489
    %v565 = vmul.f32 %v558, %v494
    %v566 = vmul.f32 %v558, %v499
    %v567 = vmul.f32 %v558, %v504
    %v568 = vmul.f32 %v558, %v509
    %v569 = vmul.f32 %v558, %v514
    %v570 = vmul.f32 %v558, %v519
    %v571 = vmul.f32 %v558, %v524
    %v572 = vmul.f32 %v558, %v529
    %v573 = vmul.f32 %v558, %v534
    %v574 = vmul.f32 %v558, %v539
    %v575 = vsel %vm542, %v464, %v559
    %v576 = vsel %vm543, %v469, %v560
    %v577 = vsel %vm544, %v474, %v561
    %v578 = vsel %vm545, %v479, %v562
    %v579 = vsel %vm546, %v484, %v563
    %v580 = vsel %vm547, %v489, %v564
    %v581 = vsel %vm548, %v494, %v565
    %v582 = vsel %vm549, %v499, %v566
    %v583 = vsel %vm550, %v504, %v567
    %v584 = vsel %vm551, %v509, %v568
    %v585 = vsel %vm552, %v514, %v569
    %v586 = vsel %vm553, %v519, %v570
    %v587 = vsel %vm554, %v524, %v571
    %v588 = vsel %vm555, %v529, %v572
    %v589 = vsel %vm556, %v534, %v573
    %v590 = vsel %vm557, %v539, %v574
    %v591 = vmul.f32 %v306, %v575
    %v592 = vmul.f32 %v307, %v576
    %v593 = vmul.f32 %v308, %v577
    %v594 = vmul.f32 %v309, %v578
    %v595 = vmul.f32 %v310, %v579
    %v596 = vmul.f32 %v311, %v580
    %v597 = vmul.f32 %v312, %v581
    %v598 = vmul.f32 %v313, %v582
    %v599 = vmul.f32 %v314, %v583
    %v600 = vmul.f32 %v315, %v584
    %v601 = vmul.f32 %v316, %v585
    %v602 = vmul.f32 %v317, %v586
    %v603 = vmul.f32 %v318, %v587
    %v604 = vmul.f32 %v319, %v588
    %v605 = vmul.f32 %v320, %v589
    %v606 = vmul.f32 %v321, %v590
    %v607 = vld [vmem:[%s3] sm:$0xff]
    %v608 = vld [vmem:[%s3 + $0x8] sm:$0xff]
    %v609 = vld [vmem:[%s3 + $0x10] sm:$0xff]
    %v610 = vld [vmem:[%s3 + $0x18] sm:$0xff]
    %v611 = vld [vmem:[%s3 + $0x20] sm:$0xff]
    %v612 = vld [vmem:[%s3 + $0x28] sm:$0xff]
    %v613 = vld [vmem:[%s3 + $0x30] sm:$0xff]
    %v614 = vld [vmem:[%s3 + $0x38] sm:$0xff]
    %v615 = vld [vmem:[%s3 + $0x40] sm:$0xff]
    %v616 = vld [vmem:[%s3 + $0x48] sm:$0xff]
    %v617 = vld [vmem:[%s3 + $0x50] sm:$0xff]
    %v618 = vld [vmem:[%s3 + $0x58] sm:$0xff]
    %v619 = vld [vmem:[%s3 + $0x60] sm:$0xff]
    %v620 = vld [vmem:[%s3 + $0x68] sm:$0xff]
    %v621 = vld [vmem:[%s3 + $0x70] sm:$0xff]
    %v622 = vld [vmem:[%s3 + $0x78] sm:$0xff]
    %v623 = vld [vmem:[%s8] sm:$0x1]
    %v625 = vlaneseq
    %v626 = vshrl.u32 %v625, 7
    %v627 = vsub.s32 0, %v626
    %v628 = vrot.slane %v623, %v627
    %v630 = vmul.f32 %v591, %v628
    %v631 = vmul.f32 %v592, %v628
    %v632 = vmul.f32 %v593, %v628
    %v633 = vmul.f32 %v594, %v628
    %v634 = vmul.f32 %v595, %v628
    %v635 = vmul.f32 %v596, %v628
    %v636 = vmul.f32 %v597, %v628
    %v637 = vmul.f32 %v598, %v628
    %v638 = vmul.f32 %v599, %v628
    %v639 = vmul.f32 %v600, %v628
    %v640 = vmul.f32 %v601, %v628
    %v641 = vmul.f32 %v602, %v628
    %v642 = vmul.f32 %v603, %v628
    %v643 = vmul.f32 %v604, %v628
    %v644 = vmul.f32 %v605, %v628
    %v645 = vmul.f32 %v606, %v628
    %v646 = vld [vmem:[%s9] sm:$0x1]
    %v648 = vlaneseq
    %v649 = vshrl.u32 %v648, 7
    %v650 = vsub.s32 0, %v649
    %v651 = vrot.slane %v646, %v650
    %v653 = vmul.f32 %v607, %v651
    %v654 = vmul.f32 %v608, %v651
    %v655 = vmul.f32 %v609, %v651
    %v656 = vmul.f32 %v610, %v651
    %v657 = vmul.f32 %v611, %v651
    %v658 = vmul.f32 %v612, %v651
    %v659 = vmul.f32 %v613, %v651
    %v660 = vmul.f32 %v614, %v651
    %v661 = vmul.f32 %v615, %v651
    %v662 = vmul.f32 %v616, %v651
    %v663 = vmul.f32 %v617, %v651
    %v664 = vmul.f32 %v618, %v651
    %v665 = vmul.f32 %v619, %v651
    %v666 = vmul.f32 %v620, %v651
    %v667 = vmul.f32 %v621, %v651
    %v668 = vmul.f32 %v622, %v651
    %669 = vadd.xlane.f32.xlu0 %v630
    %v670 = vpop.xlane.xlu0 %669
    %671 = vadd.xlane.f32.xlu0 %v631
    %v672 = vpop.xlane.xlu0 %671
    %673 = vadd.xlane.f32.xlu0 %v632
    %v674 = vpop.xlane.xlu0 %673
    %675 = vadd.xlane.f32.xlu0 %v633
    %v676 = vpop.xlane.xlu0 %675
    %677 = vadd.xlane.f32.xlu0 %v634
    %v678 = vpop.xlane.xlu0 %677
    %679 = vadd.xlane.f32.xlu0 %v635
    %v680 = vpop.xlane.xlu0 %679
    %681 = vadd.xlane.f32.xlu0 %v636
    %v682 = vpop.xlane.xlu0 %681
    %683 = vadd.xlane.f32.xlu0 %v637
    %v684 = vpop.xlane.xlu0 %683
    %685 = vadd.xlane.f32.xlu0 %v638
    %v686 = vpop.xlane.xlu0 %685
    %687 = vadd.xlane.f32.xlu0 %v639
    %v688 = vpop.xlane.xlu0 %687
    %689 = vadd.xlane.f32.xlu0 %v640
    %v690 = vpop.xlane.xlu0 %689
    %691 = vadd.xlane.f32.xlu0 %v641
    %v692 = vpop.xlane.xlu0 %691
    %693 = vadd.xlane.f32.xlu0 %v642
    %v694 = vpop.xlane.xlu0 %693
    %695 = vadd.xlane.f32.xlu0 %v643
    %v696 = vpop.xlane.xlu0 %695
    %697 = vadd.xlane.f32.xlu0 %v644
    %v698 = vpop.xlane.xlu0 %697
    %699 = vadd.xlane.f32.xlu0 %v645
    %v700 = vpop.xlane.xlu0 %699
    %vm701 = vcmask 703488
    %v702 = vsel %vm701, %v653, 0.0
    %703 = vadd.xlane.f32.xlu0 %v702
    %v704 = vpop.xlane.xlu0 %703
    %v705 = vsel %vm701, %v654, 0.0
    %706 = vadd.xlane.f32.xlu0 %v705
    %v707 = vpop.xlane.xlu0 %706
    %v708 = vsel %vm701, %v655, 0.0
    %709 = vadd.xlane.f32.xlu0 %v708
    %v710 = vpop.xlane.xlu0 %709
    %v711 = vsel %vm701, %v656, 0.0
    %712 = vadd.xlane.f32.xlu0 %v711
    %v713 = vpop.xlane.xlu0 %712
    %v714 = vsel %vm701, %v657, 0.0
    %715 = vadd.xlane.f32.xlu0 %v714
    %v716 = vpop.xlane.xlu0 %715
    %v717 = vsel %vm701, %v658, 0.0
    %718 = vadd.xlane.f32.xlu0 %v717
    %v719 = vpop.xlane.xlu0 %718
    %v720 = vsel %vm701, %v659, 0.0
    %721 = vadd.xlane.f32.xlu0 %v720
    %v722 = vpop.xlane.xlu0 %721
    %v723 = vsel %vm701, %v660, 0.0
    %724 = vadd.xlane.f32.xlu0 %v723
    %v725 = vpop.xlane.xlu0 %724
    %v726 = vsel %vm701, %v661, 0.0
    %727 = vadd.xlane.f32.xlu0 %v726
    %v728 = vpop.xlane.xlu0 %727
    %v729 = vsel %vm701, %v662, 0.0
    %730 = vadd.xlane.f32.xlu0 %v729
    %v731 = vpop.xlane.xlu0 %730
    %v732 = vsel %vm701, %v663, 0.0
    %733 = vadd.xlane.f32.xlu0 %v732
    %v734 = vpop.xlane.xlu0 %733
    %v735 = vsel %vm701, %v664, 0.0
    %736 = vadd.xlane.f32.xlu0 %v735
    %v737 = vpop.xlane.xlu0 %736
    %v738 = vsel %vm701, %v665, 0.0
    %739 = vadd.xlane.f32.xlu0 %v738
    %v740 = vpop.xlane.xlu0 %739
    %v741 = vsel %vm701, %v666, 0.0
    %742 = vadd.xlane.f32.xlu0 %v741
    %v743 = vpop.xlane.xlu0 %742
    %v744 = vsel %vm701, %v667, 0.0
    %745 = vadd.xlane.f32.xlu0 %v744
    %v746 = vpop.xlane.xlu0 %745
    %v747 = vsel %vm701, %v668, 0.0
    %748 = vadd.xlane.f32.xlu0 %v747
    %v749 = vpop.xlane.xlu0 %748
    %v750 = vadd.f32 %v670, %v704
    %v751 = vadd.f32 %v672, %v707
    %v752 = vadd.f32 %v674, %v710
    %v753 = vadd.f32 %v676, %v713
    %v754 = vadd.f32 %v678, %v716
    %v755 = vadd.f32 %v680, %v719
    %v756 = vadd.f32 %v682, %v722
    %v757 = vadd.f32 %v684, %v725
    %v758 = vadd.f32 %v686, %v728
    %v759 = vadd.f32 %v688, %v731
    %v760 = vadd.f32 %v690, %v734
    %v761 = vadd.f32 %v692, %v737
    %v762 = vadd.f32 %v694, %v740
    %v763 = vadd.f32 %v696, %v743
    %v764 = vadd.f32 %v698, %v746
    %v765 = vadd.f32 %v700, %v749
    %v766 = vstv %s51
    %v767 = vadd.f32 %v750, %v766
    %v768 = vadd.f32 %v751, %v766
    %v769 = vadd.f32 %v752, %v766
    %v770 = vadd.f32 %v753, %v766
    %v771 = vadd.f32 %v754, %v766
    %v772 = vadd.f32 %v755, %v766
    %v773 = vadd.f32 %v756, %v766
    %v774 = vadd.f32 %v757, %v766
    %v775 = vadd.f32 %v758, %v766
    %v776 = vadd.f32 %v759, %v766
    %v777 = vadd.f32 %v760, %v766
    %v778 = vadd.f32 %v761, %v766
    %v779 = vadd.f32 %v762, %v766
    %v780 = vadd.f32 %v763, %v766
    %v781 = vadd.f32 %v764, %v766
    %v782 = vadd.f32 %v765, %v766
    %v799 = vlaneseq
    %v800 = vand.u32 %v799, 127
    %v801 = vlaneseq
    %v802 = vshrl.u32 %v801, 7
    %v803 = vsub.s32 %v800, %v802
    %v804 = vrot.slane %v767, %v803
    %v805 = vadd.s32 %v800, 4294967288
    %v806 = vlaneseq
    %v807 = vshrl.u32 %v806, 7
    %v808 = vsub.s32 %v805, %v807
    %v809 = vrot.slane %v768, %v808
    %vm810 = vcmask 130112
    %v811 = vsel %vm810, %v809, %v804
    %v812 = vadd.s32 %v800, 4294967280
    %v813 = vlaneseq
    %v814 = vshrl.u32 %v813, 7
    %v815 = vsub.s32 %v812, %v814
    %v816 = vrot.slane %v769, %v815
    %vm817 = vcmask 195712
    %v818 = vsel %vm817, %v816, %v811
    %v819 = vadd.s32 %v800, 4294967272
    %v820 = vlaneseq
    %v821 = vshrl.u32 %v820, 7
    %v822 = vsub.s32 %v819, %v821
    %v823 = vrot.slane %v770, %v822
    %vm824 = vcmask 261312
    %v825 = vsel %vm824, %v823, %v818
    %v826 = vadd.s32 %v800, 4294967264
    %v827 = vlaneseq
    %v828 = vshrl.u32 %v827, 7
    %v829 = vsub.s32 %v826, %v828
    %v830 = vrot.slane %v771, %v829
    %vm831 = vcmask 326912
    %v832 = vsel %vm831, %v830, %v825
    %v833 = vadd.s32 %v800, 4294967256
    %v834 = vlaneseq
    %v835 = vshrl.u32 %v834, 7
    %v836 = vsub.s32 %v833, %v835
    %v837 = vrot.slane %v772, %v836
    %vm838 = vcmask 392512
    %v839 = vsel %vm838, %v837, %v832
    %v840 = vadd.s32 %v800, 4294967248
    %v841 = vlaneseq
    %v842 = vshrl.u32 %v841, 7
    %v843 = vsub.s32 %v840, %v842
    %v844 = vrot.slane %v773, %v843
    %vm845 = vcmask 458112
    %v846 = vsel %vm845, %v844, %v839
    %v847 = vadd.s32 %v800, 4294967240
    %v848 = vlaneseq
    %v849 = vshrl.u32 %v848, 7
    %v850 = vsub.s32 %v847, %v849
    %v851 = vrot.slane %v774, %v850
    %vm852 = vcmask 523712
    %v853 = vsel %vm852, %v851, %v846
    %v854 = vadd.s32 %v800, 4294967232
    %v855 = vlaneseq
    %v856 = vshrl.u32 %v855, 7
    %v857 = vsub.s32 %v854, %v856
    %v858 = vrot.slane %v775, %v857
    %vm859 = vcmask 589312
    %v860 = vsel %vm859, %v858, %v853
    %v861 = vadd.s32 %v800, 4294967224
    %v862 = vlaneseq
    %v863 = vshrl.u32 %v862, 7
    %v864 = vsub.s32 %v861, %v863
    %v865 = vrot.slane %v776, %v864
    %vm866 = vcmask 654912
    %v867 = vsel %vm866, %v865, %v860
    %v868 = vadd.s32 %v800, 4294967216
    %v869 = vlaneseq
    %v870 = vshrl.u32 %v869, 7
    %v871 = vsub.s32 %v868, %v870
    %v872 = vrot.slane %v777, %v871
    %vm873 = vcmask 720512
    %v874 = vsel %vm873, %v872, %v867
    %v875 = vadd.s32 %v800, 4294967208
    %v876 = vlaneseq
    %v877 = vshrl.u32 %v876, 7
    %v878 = vsub.s32 %v875, %v877
    %v879 = vrot.slane %v778, %v878
    %vm880 = vcmask 786112
    %v881 = vsel %vm880, %v879, %v874
    %v882 = vadd.s32 %v800, 4294967200
    %v883 = vlaneseq
    %v884 = vshrl.u32 %v883, 7
    %v885 = vsub.s32 %v882, %v884
    %v886 = vrot.slane %v779, %v885
    %vm887 = vcmask 851712
    %v888 = vsel %vm887, %v886, %v881
    %v889 = vadd.s32 %v800, 4294967192
    %v890 = vlaneseq
    %v891 = vshrl.u32 %v890, 7
    %v892 = vsub.s32 %v889, %v891
    %v893 = vrot.slane %v780, %v892
    %vm894 = vcmask 917312
    %v895 = vsel %vm894, %v893, %v888
    %v896 = vadd.s32 %v800, 4294967184
    %v897 = vlaneseq
    %v898 = vshrl.u32 %v897, 7
    %v899 = vsub.s32 %v896, %v898
    %v900 = vrot.slane %v781, %v899
    %vm901 = vcmask 982912
    %v902 = vsel %vm901, %v900, %v895
    %v903 = vadd.s32 %v800, 4294967176
    %v904 = vlaneseq
    %v905 = vshrl.u32 %v904, 7
    %v906 = vsub.s32 %v903, %v905
    %v907 = vrot.slane %v782, %v906
    %vm908 = vcmask 1048512
    %v909 = vsel %vm908, %v907, %v902
    %911 = vst [vmem:[#allocation5] sm:$0x1] %v909
    // Predicated region
    $region46: #{tpu_custom_call.1} parent=1 // pred_check
      _
    $region47: #{tpu_custom_call.1} parent=1 // pred_check_branch
      %913 = sbr.rel (0) target = $region49
    $region48: #{tpu_custom_call.1} parent=1 // pred_region
      %s915 = ssub.s32 16, 16
      %916 = vsyncadd [#allocation3], %s915
      %s918 = sshll.u32 [#allocation5], 4
      %s919 = int_to_ptr.vmem [resolvable:$true] %s918
      %921 = dma.vmem_to_hbm [thread:$0]  %s919, 16, %s10, [#allocation3]
    $region49: #{tpu_custom_call.1} parent=1 // pred_fallthru
      _
    // Predicated region
    $region50: #{tpu_custom_call.1} parent=1 // pred_check
      _
    $region51: #{tpu_custom_call.1} parent=1 // pred_check_branch
      %923 = sbr.rel (0) target = $region53
    $region52: #{tpu_custom_call.1} parent=1 // pred_region
      %924 = dma.done [#allocation3], 16
    $region53: #{tpu_custom_call.1} parent=1 // pred_fallthru
      _
    %925 = vsyncpa [#allocation3], 1
    %926 = vsyncpa [#allocation4], 1

</llo_original>
